<compile_context>
chip_gen: v7x
topology: tpu7x:2x2x1
jax: 0.10.0
libtpu: 0.0.40
codegen_flags: <defaults>
</compile_context>

<pallas_src>
import functools

import jax
import jax.numpy as jnp
from jax.experimental import pallas as pl
from jax.experimental.pallas import tpu as pltpu

BN_EPS = 0.001
LANE = 128      # lane width: pad feature dims to this
SUBLANE = 8     # f32 sublane packing: pad batch dim to this


def _ceil_to(n, m):
    return ((n + m - 1) // m) * m


def _fused_fc_kernel(n_layers, true_batch, *refs):
    """refs = (x_ref, [w, b, gamma, beta] * n_layers, o_ref).

    One fused kernel for the whole Linear -> BN(batch stats) -> ReLU stack.
    Activations never leave VMEM between layers. W is stored (n_in, n_out)
    bf16 (no in-kernel transpose); matmul accumulates in f32; all BN and
    activation math stays f32.
    """
    x_ref = refs[0]
    o_ref = refs[-1]
    layer_refs = refs[1:-1]

    h = x_ref[...]                               # (B_pad, f0_pad) f32
    b_pad = h.shape[0]
    need_mask = true_batch != b_pad              # static Python bool
    if need_mask:
        row_mask = (
            jax.lax.broadcasted_iota(jnp.int32, (b_pad, 1), 0) < true_batch
        )
        inv_n = jnp.float32(1.0 / true_batch)

    for i in range(n_layers):
        w_ref, b_ref, g_ref, be_ref = layer_refs[4 * i:4 * i + 4]

        # Linear on the MXU: bf16 operands, f32 accumulation, no transpose.
        y = jnp.dot(h.astype(jnp.bfloat16), w_ref[...],
                    preferred_element_type=jnp.float32) + b_ref[...]

        # BatchNorm1d, training-mode batch statistics (biased var), eps=1e-3.
        # Padded feature columns are exactly zero (zero-padded W/b/gamma/beta)
        # and stay zero, so they never corrupt the next layer.
        if need_mask:
            ym = jnp.where(row_mask, y, 0.0)
            mean = jnp.sum(ym, axis=0, keepdims=True) * inv_n
            cen = jnp.where(row_mask, y - mean, 0.0)
            var = jnp.sum(cen * cen, axis=0, keepdims=True) * inv_n
        else:
            mean = jnp.mean(y, axis=0, keepdims=True)
            var = jnp.mean(jnp.square(y - mean), axis=0, keepdims=True)

        y = (y - mean) * jax.lax.rsqrt(var + BN_EPS)
        y = y * g_ref[...] + be_ref[...]

        # Activation: ReLU (negative_slope <= 0).
        h = jnp.maximum(y, 0.0)

    o_ref[...] = h.astype(o_ref.dtype)


def init_fc_params(key, features):
    """torch.nn.Linear / BatchNorm1d default-style init (f32, torch layout)."""
    params = []
    for n_in, n_out in zip(features[:-1], features[1:]):
        key, kw, kb = jax.random.split(key, 3)
        bound = 1.0 / float(n_in) ** 0.5
        w = jax.random.uniform(kw, (n_out, n_in), jnp.float32, -bound, bound)
        b = jax.random.uniform(kb, (n_out,), jnp.float32, -bound, bound)
        gamma = jnp.ones((n_out,), jnp.float32)
        beta = jnp.zeros((n_out,), jnp.float32)
        params.append((w, b, gamma, beta))
    return params


def prepare_params(params):
    """One-time prep: transpose W to (n_in, n_out), zero-pad features to 128
    lanes, cast W to bf16. Padded columns get b=gamma=beta=0 so they stay
    exactly zero through BN/ReLU."""
    prepared = []
    for w, b, gamma, beta in params:
        n_out, n_in = w.shape
        n_in_p = _ceil_to(n_in, LANE)
        n_out_p = _ceil_to(n_out, LANE)
        wt = (jnp.zeros((n_in_p, n_out_p), jnp.bfloat16)
              .at[:n_in, :n_out].set(w.T.astype(jnp.bfloat16)))
        bp = jnp.zeros((1, n_out_p), jnp.float32).at[:, :n_out].set(b[None, :])
        gp = jnp.zeros((1, n_out_p), jnp.float32).at[:, :n_out].set(gamma[None, :])
        bep = jnp.zeros((1, n_out_p), jnp.float32).at[:, :n_out].set(beta[None, :])
        prepared.append((wt, bp, gp, bep))
    return prepared


def build_fc_forward(params):
    """Returns a jitted forward(x) that runs the whole FC stack in one fused
    Pallas kernel (everything fits in VMEM at these sizes; no grid needed)."""
    prepared = prepare_params(params)
    n_layers = len(params)
    out_feat = params[-1][0].shape[0]

    @jax.jit
    def forward(x):
        B, f0 = x.shape
        B_pad = _ceil_to(B, SUBLANE)
        f0_pad = prepared[0][0].shape[0]
        out_feat_pad = prepared[-1][0].shape[1]

        x_pad = jnp.zeros((B_pad, f0_pad), jnp.float32).at[:B, :f0].set(x)

        flat_params = []
        flops = 0
        transcendentals = 0
        bytes_accessed = x_pad.size * 4 + B_pad * out_feat_pad * 4
        for (wt, bp, gp, bep) in prepared:
            flat_params.extend((wt, bp, gp, bep))
            ni, no = wt.shape
            flops += 2 * B_pad * ni * no
            transcendentals += no                      # rsqrt per feature
            bytes_accessed += wt.size * 2 + (bp.size + gp.size + bep.size) * 4

        vmem = pl.BlockSpec(memory_space=pltpu.MemorySpace.VMEM)
        kernel = functools.partial(_fused_fc_kernel, n_layers, B)

        out_pad = pl.pallas_call(
            kernel,
            out_shape=jax.ShapeDtypeStruct((B_pad, out_feat_pad), jnp.float32),
            in_specs=[vmem] * (1 + 4 * n_layers),
            out_specs=vmem,
            compiler_params=pltpu.CompilerParams(
                vmem_limit_bytes=32 * 1024 * 1024),
            cost_estimate=pl.CostEstimate(
                flops=flops,
                transcendentals=transcendentals,
                bytes_accessed=bytes_accessed),
        )(x_pad, *flat_params)

        return out_pad[:B, :out_feat]

    return forward


def fc_forward_ref_f32(x, params):
    """Pure-JAX, pure-f32 reference of the exact torch semantics."""
    for w, b, gamma, beta in params:
        y = x @ w.T + b[None, :]
        mean = jnp.mean(y, axis=0, keepdims=True)
        var = jnp.mean((y - mean) ** 2, axis=0, keepdims=True)
        y = (y - mean) / jnp.sqrt(var + BN_EPS) * gamma[None, :] + beta[None, :]
        x = jnp.maximum(y, 0.0)
    return x


def fc_forward_ref_mixed(x, params):
    """Pure-JAX reference with the same mixed precision as the kernel
    (bf16 matmul operands, f32 accumulation and BN epilogue)."""
    for w, b, gamma, beta in params:
        y = jnp.dot(x.astype(jnp.bfloat16), w.T.astype(jnp.bfloat16),
                    preferred_element_type=jnp.float32) + b[None, :]
        mean = jnp.mean(y, axis=0, keepdims=True)
        var = jnp.mean((y - mean) ** 2, axis=0, keepdims=True)
        y = (y - mean) * jax.lax.rsqrt(var + BN_EPS)
        y = y * gamma[None, :] + beta[None, :]
        x = jnp.maximum(y, 0.0)
    return x


if __name__ == "__main__":
    # Small shapes consistent with the module: features=[32, 64, 32], batch=8.
    features = [32, 64, 32]
    batch = 8

    key = jax.random.PRNGKey(0)
    key, kx = jax.random.split(key)
    x = jax.random.normal(kx, (batch, features[0]), jnp.float32)
    params = init_fc_params(key, features)

    forward = build_fc_forward(params)
    out = jax.block_until_ready(forward(x))

    assert out.shape == (batch, features[-1])

    ref_mixed = fc_forward_ref_mixed(x, params)   # same precision as kernel
    ref_f32 = fc_forward_ref_f32(x, params)       # exact torch-f32 semantics
    assert jnp.allclose(out, ref_mixed, atol=2e-3, rtol=2e-3), float(
        jnp.max(jnp.abs(out - ref_mixed)))
    assert jnp.allclose(out, ref_f32, atol=5e-2, rtol=5e-2), float(
        jnp.max(jnp.abs(out - ref_f32)))

    # TODO(synk): dropout (dropout_rate > 0) not implemented -- default config disables it.
    print("KERNEL_OK")
</pallas_src>

<mosaic_0001>
module attributes {stable_mosaic.version = 11 : i64} {
  func.func @_fused_fc_kernel(%arg0: memref<8x128xf32, #tpu.memory_space<vmem>>, %arg1: memref<128x128xbf16, #tpu.memory_space<vmem>>, %arg2: memref<1x128xf32, #tpu.memory_space<vmem>>, %arg3: memref<1x128xf32, #tpu.memory_space<vmem>>, %arg4: memref<1x128xf32, #tpu.memory_space<vmem>>, %arg5: memref<128x128xbf16, #tpu.memory_space<vmem>>, %arg6: memref<1x128xf32, #tpu.memory_space<vmem>>, %arg7: memref<1x128xf32, #tpu.memory_space<vmem>>, %arg8: memref<1x128xf32, #tpu.memory_space<vmem>>, %arg9: memref<8x128xf32, #tpu.memory_space<vmem>>) attributes {dimension_semantics = [], scalar_prefetch = 0 : i64, scratch_operands = 0 : i64, tpu.core_type = #tpu.core_type<tc>} {
    %c0 = arith.constant 0 : index
    %c0_0 = arith.constant 0 : index
    %0 = vector.load %arg0[%c0, %c0_0] : memref<8x128xf32, #tpu.memory_space<vmem>>, vector<8x128xf32>
    %1 = arith.truncf %0 : vector<8x128xf32> to vector<8x128xbf16>
    %c0_1 = arith.constant 0 : index
    %c0_2 = arith.constant 0 : index
    %2 = vector.load %arg1[%c0_1, %c0_2] : memref<128x128xbf16, #tpu.memory_space<vmem>>, vector<128x128xbf16>
    %cst = arith.constant dense<0.000000e+00> : vector<8x128xf32>
    %3 = tpu.matmul %1, %2, %cst {dimension_numbers = #tpu.dot_dimension_numbers<[1], [0], [0], [1], [0, 0, 1, 1], [], []>} : vector<8x128xbf16>, vector<128x128xbf16>, vector<8x128xf32> -> vector<8x128xf32>
    %c0_3 = arith.constant 0 : index
    %c0_4 = arith.constant 0 : index
    %4 = vector.load %arg2[%c0_3, %c0_4] : memref<1x128xf32, #tpu.memory_space<vmem>>, vector<1x128xf32>
    %5 = vector.broadcast %4 : vector<1x128xf32> to vector<8x128xf32>
    %6 = arith.addf %3, %5 : vector<8x128xf32>
    %cst_5 = arith.constant dense<0.000000e+00> : vector<128xf32>
    %7 = vector.multi_reduction <add>, %6, %cst_5 [0] : vector<8x128xf32> to vector<128xf32>
    %8 = vector.shape_cast %7 : vector<128xf32> to vector<1x128xf32>
    %cst_6 = arith.constant 8.000000e+00 : f32
    %9 = vector.broadcast %cst_6 : f32 to vector<1x128xf32>
    %10 = arith.divf %8, %9 : vector<1x128xf32>
    %11 = vector.broadcast %10 : vector<1x128xf32> to vector<8x128xf32>
    %12 = arith.subf %6, %11 : vector<8x128xf32>
    %13 = arith.mulf %12, %12 : vector<8x128xf32>
    %cst_7 = arith.constant dense<0.000000e+00> : vector<128xf32>
    %14 = vector.multi_reduction <add>, %13, %cst_7 [0] : vector<8x128xf32> to vector<128xf32>
    %15 = vector.shape_cast %14 : vector<128xf32> to vector<1x128xf32>
    %cst_8 = arith.constant 8.000000e+00 : f32
    %16 = vector.broadcast %cst_8 : f32 to vector<1x128xf32>
    %17 = arith.divf %15, %16 : vector<1x128xf32>
    %18 = vector.broadcast %10 : vector<1x128xf32> to vector<8x128xf32>
    %19 = arith.subf %6, %18 : vector<8x128xf32>
    %cst_9 = arith.constant 1.000000e-03 : f32
    %20 = vector.broadcast %cst_9 : f32 to vector<1x128xf32>
    %21 = arith.addf %17, %20 : vector<1x128xf32>
    %22 = math.rsqrt %21 : vector<1x128xf32>
    %23 = vector.broadcast %22 : vector<1x128xf32> to vector<8x128xf32>
    %24 = arith.mulf %19, %23 : vector<8x128xf32>
    %c0_10 = arith.constant 0 : index
    %c0_11 = arith.constant 0 : index
    %25 = vector.load %arg3[%c0_10, %c0_11] : memref<1x128xf32, #tpu.memory_space<vmem>>, vector<1x128xf32>
    %26 = vector.broadcast %25 : vector<1x128xf32> to vector<8x128xf32>
    %27 = arith.mulf %24, %26 : vector<8x128xf32>
    %c0_12 = arith.constant 0 : index
    %c0_13 = arith.constant 0 : index
    %28 = vector.load %arg4[%c0_12, %c0_13] : memref<1x128xf32, #tpu.memory_space<vmem>>, vector<1x128xf32>
    %29 = vector.broadcast %28 : vector<1x128xf32> to vector<8x128xf32>
    %30 = arith.addf %27, %29 : vector<8x128xf32>
    %cst_14 = arith.constant 0.000000e+00 : f32
    %31 = vector.broadcast %cst_14 : f32 to vector<8x128xf32>
    %32 = arith.maximumf %30, %31 : vector<8x128xf32>
    %33 = arith.truncf %32 : vector<8x128xf32> to vector<8x128xbf16>
    %c0_15 = arith.constant 0 : index
    %c0_16 = arith.constant 0 : index
    %34 = vector.load %arg5[%c0_15, %c0_16] : memref<128x128xbf16, #tpu.memory_space<vmem>>, vector<128x128xbf16>
    %cst_17 = arith.constant dense<0.000000e+00> : vector<8x128xf32>
    %35 = tpu.matmul %33, %34, %cst_17 {dimension_numbers = #tpu.dot_dimension_numbers<[1], [0], [0], [1], [0, 0, 1, 1], [], []>} : vector<8x128xbf16>, vector<128x128xbf16>, vector<8x128xf32> -> vector<8x128xf32>
    %c0_18 = arith.constant 0 : index
    %c0_19 = arith.constant 0 : index
    %36 = vector.load %arg6[%c0_18, %c0_19] : memref<1x128xf32, #tpu.memory_space<vmem>>, vector<1x128xf32>
    %37 = vector.broadcast %36 : vector<1x128xf32> to vector<8x128xf32>
    %38 = arith.addf %35, %37 : vector<8x128xf32>
    %cst_20 = arith.constant dense<0.000000e+00> : vector<128xf32>
    %39 = vector.multi_reduction <add>, %38, %cst_20 [0] : vector<8x128xf32> to vector<128xf32>
    %40 = vector.shape_cast %39 : vector<128xf32> to vector<1x128xf32>
    %cst_21 = arith.constant 8.000000e+00 : f32
    %41 = vector.broadcast %cst_21 : f32 to vector<1x128xf32>
    %42 = arith.divf %40, %41 : vector<1x128xf32>
    %43 = vector.broadcast %42 : vector<1x128xf32> to vector<8x128xf32>
    %44 = arith.subf %38, %43 : vector<8x128xf32>
    %45 = arith.mulf %44, %44 : vector<8x128xf32>
    %cst_22 = arith.constant dense<0.000000e+00> : vector<128xf32>
    %46 = vector.multi_reduction <add>, %45, %cst_22 [0] : vector<8x128xf32> to vector<128xf32>
    %47 = vector.shape_cast %46 : vector<128xf32> to vector<1x128xf32>
    %cst_23 = arith.constant 8.000000e+00 : f32
    %48 = vector.broadcast %cst_23 : f32 to vector<1x128xf32>
    %49 = arith.divf %47, %48 : vector<1x128xf32>
    %50 = vector.broadcast %42 : vector<1x128xf32> to vector<8x128xf32>
    %51 = arith.subf %38, %50 : vector<8x128xf32>
    %cst_24 = arith.constant 1.000000e-03 : f32
    %52 = vector.broadcast %cst_24 : f32 to vector<1x128xf32>
    %53 = arith.addf %49, %52 : vector<1x128xf32>
    %54 = math.rsqrt %53 : vector<1x128xf32>
    %55 = vector.broadcast %54 : vector<1x128xf32> to vector<8x128xf32>
    %56 = arith.mulf %51, %55 : vector<8x128xf32>
    %c0_25 = arith.constant 0 : index
    %c0_26 = arith.constant 0 : index
    %57 = vector.load %arg7[%c0_25, %c0_26] : memref<1x128xf32, #tpu.memory_space<vmem>>, vector<1x128xf32>
    %58 = vector.broadcast %57 : vector<1x128xf32> to vector<8x128xf32>
    %59 = arith.mulf %56, %58 : vector<8x128xf32>
    %c0_27 = arith.constant 0 : index
    %c0_28 = arith.constant 0 : index
    %60 = vector.load %arg8[%c0_27, %c0_28] : memref<1x128xf32, #tpu.memory_space<vmem>>, vector<1x128xf32>
    %61 = vector.broadcast %60 : vector<1x128xf32> to vector<8x128xf32>
    %62 = arith.addf %59, %61 : vector<8x128xf32>
    %cst_29 = arith.constant 0.000000e+00 : f32
    %63 = vector.broadcast %cst_29 : f32 to vector<8x128xf32>
    %64 = arith.maximumf %62, %63 : vector<8x128xf32>
    %c0_30 = arith.constant 0 : index
    %c0_31 = arith.constant 0 : index
    %65 = vector.load %arg9[%c0_30, %c0_31] : memref<8x128xf32, #tpu.memory_space<vmem>>, vector<8x128xf32>
    tpu.vector_store %arg9[%c0_30, %c0_31], %64 {strides = array<i32>} : memref<8x128xf32, #tpu.memory_space<vmem>>, vector<8x128xf32>,
    return
  }
}

</mosaic_0001>

<llo_original>
// kernel: forward.1
$region0: #{forward.1}
  #allocation0 [shape = 'u32[]', space=smem, size = 0x4, offset = 0x4, fixed_abs, tag = 'smem constant byte address 0x4 - core index']
  #allocation1 [shape = 'u32[144,128]{1,0:T(1,128)}', space=vmem, size = 0x12000, scoped, tag = 'internal scratch']
  %s0 = inlined_call_operand.vmem [shape: f32[8,128], index: 0, kind: input, shape index: {}]
  %s1 = inlined_call_operand.hbm [shape: bf16[128,128], index: 1, kind: input, shape index: {}]
  %s2 = inlined_call_operand.vmem [shape: f32[1,128], index: 2, kind: input, shape index: {}]
  %s3 = inlined_call_operand.vmem [shape: f32[1,128], index: 3, kind: input, shape index: {}]
  %s4 = inlined_call_operand.vmem [shape: f32[1,128], index: 4, kind: input, shape index: {}, may-alias: {4,8}]
  %s5 = inlined_call_operand.vmem [shape: bf16[128,128], index: 5, kind: input, shape index: {}]
  %s6 = inlined_call_operand.vmem [shape: f32[1,128], index: 6, kind: input, shape index: {}]
  %s7 = inlined_call_operand.vmem [shape: f32[1,128], index: 7, kind: input, shape index: {}]
  %s8 = inlined_call_operand.vmem [shape: f32[1,128], index: 8, kind: input, shape index: {}, may-alias: {4,8}]
  %s9 = inlined_call_operand.hbm [shape: f32[8,128], index: 9, kind: output, shape index: {}]
  %s10 = sld [smem:[#allocation0]]
  $region50: #{forward.1} parent=0
    _
  %s12 = ssub.s32 1, %s10
  %s13 = scalar_select 0, %s12, %s10
  $region1: #{forward.1} parent=0
    #allocation2 [shape = 'u8[32768]{0}', space=vmem, size = 0x8000, scoped, tag = 'input window, operand 1, single buffered']
    #allocation3 [shape = 's32[1]{0}', space=sflag, size = 0x4, scoped, tag = 'scoped memory for forward.1']
    #allocation4 [shape = 's32[1]{0}', space=sflag, size = 0x4, scoped, tag = 'scoped memory for forward.1']
    #allocation5 [shape = 'u8[4096]{0}', space=vmem, size = 0x1000, scoped, tag = 'output window, operand 0, single buffered']
    %14 = vsyncpa [#allocation3], 0
    %15 = vsyncpa [#allocation4], 0
    // Predicated region
    $region2: #{forward.1} parent=1 // pred_check
      _
    $region3: #{forward.1} parent=1 // pred_check_branch
      %17 = sbr.rel (0) target = $region5
    $region4: #{forward.1} parent=1 // pred_region
      _
    $region5: #{forward.1} parent=1 // pred_fallthru
      _
    // Predicated region
    $region6: #{forward.1} parent=1 // pred_check
      _
    $region7: #{forward.1} parent=1 // pred_check_branch
      %19 = sbr.rel (0) target = $region9
    $region8: #{forward.1} parent=1 // pred_region
      %s21 = ssub.s32 1024, 1024
      %22 = vsyncadd [#allocation3], %s21
      %s23 = sshll.u32 [#allocation2], 4
      %s24 = int_to_ptr.vmem [resolvable:$true] %s23
      %29 = dma.hbm_to_vmem [thread:$0]  %s1, 1024, %s24, [#allocation3], 64, 64, 4
    $region9: #{forward.1} parent=1 // pred_fallthru
      _
    // Predicated region
    $region10: #{forward.1} parent=1 // pred_check
      _
    $region11: #{forward.1} parent=1 // pred_check_branch
      %31 = sbr.rel (0) target = $region13
    $region12: #{forward.1} parent=1 // pred_region
      _
    $region13: #{forward.1} parent=1 // pred_fallthru
      _
    // Predicated region
    $region14: #{forward.1} parent=1 // pred_check
      _
    $region15: #{forward.1} parent=1 // pred_check_branch
      %33 = sbr.rel (0) target = $region17
    $region16: #{forward.1} parent=1 // pred_region
      _
    $region17: #{forward.1} parent=1 // pred_fallthru
      _
    // Predicated region
    $region18: #{forward.1} parent=1 // pred_check
      _
    $region19: #{forward.1} parent=1 // pred_check_branch
      %35 = sbr.rel (0) target = $region21
    $region20: #{forward.1} parent=1 // pred_region
      _
    $region21: #{forward.1} parent=1 // pred_fallthru
      _
    // Predicated region
    $region22: #{forward.1} parent=1 // pred_check
      _
    $region23: #{forward.1} parent=1 // pred_check_branch
      %37 = sbr.rel (0) target = $region25
    $region24: #{forward.1} parent=1 // pred_region
      _
    $region25: #{forward.1} parent=1 // pred_fallthru
      _
    // Predicated region
    $region26: #{forward.1} parent=1 // pred_check
      _
    $region27: #{forward.1} parent=1 // pred_check_branch
      %39 = sbr.rel (0) target = $region29
    $region28: #{forward.1} parent=1 // pred_region
      _
    $region29: #{forward.1} parent=1 // pred_fallthru
      _
    // Predicated region
    $region30: #{forward.1} parent=1 // pred_check
      _
    $region31: #{forward.1} parent=1 // pred_check_branch
      %41 = sbr.rel (0) target = $region33
    $region32: #{forward.1} parent=1 // pred_region
      _
    $region33: #{forward.1} parent=1 // pred_fallthru
      _
    // Predicated region
    $region34: #{forward.1} parent=1 // pred_check
      _
    $region35: #{forward.1} parent=1 // pred_check_branch
      %43 = sbr.rel (0) target = $region37
    $region36: #{forward.1} parent=1 // pred_region
      _
    $region37: #{forward.1} parent=1 // pred_fallthru
      _
    // Predicated region
    $region38: #{forward.1} parent=1 // pred_check
      _
    $region39: #{forward.1} parent=1 // pred_check_branch
      %45 = sbr.rel (0) target = $region41
    $region40: #{forward.1} parent=1 // pred_region
      %46 = dma.done [#allocation3], 1024
    $region41: #{forward.1} parent=1 // pred_fallthru
      _
    %v48 = vld [vmem:[%s0] sm:$0xff]
    %v49 = vpack.c.bf16 %v48, %v48
    %v50 = vld [vmem:[#allocation2] sm:$0xf]
    %v51 = vld [vmem:[#allocation2 + $0x4] sm:$0xf]
    %v52 = vld [vmem:[#allocation2 + $0x8] sm:$0xf]
    %v53 = vld [vmem:[#allocation2 + $0xc] sm:$0xf]
    %v54 = vld [vmem:[#allocation2 + $0x10] sm:$0xf]
    %v55 = vld [vmem:[#allocation2 + $0x14] sm:$0xf]
    %v56 = vld [vmem:[#allocation2 + $0x18] sm:$0xf]
    %v57 = vld [vmem:[#allocation2 + $0x1c] sm:$0xf]
    %v58 = vld [vmem:[#allocation2 + $0x20] sm:$0xf]
    %v59 = vld [vmem:[#allocation2 + $0x24] sm:$0xf]
    %v60 = vld [vmem:[#allocation2 + $0x28] sm:$0xf]
    %v61 = vld [vmem:[#allocation2 + $0x2c] sm:$0xf]
    %v62 = vld [vmem:[#allocation2 + $0x30] sm:$0xf]
    %v63 = vld [vmem:[#allocation2 + $0x34] sm:$0xf]
    %v64 = vld [vmem:[#allocation2 + $0x38] sm:$0xf]
    %v65 = vld [vmem:[#allocation2 + $0x3c] sm:$0xf]
    %v66 = vld [vmem:[%s2] sm:$0x1]
    %v68 = vlaneseq
    %v69 = vshrl.u32 %v68, 7
    %v70 = vsub.s32 0, %v69
    %v71 = vrot.slane %v66, %v70
    %v89 = vunpack.c.l.b16 %v50
    %v90 = vunpack.c.l.b16 %v51
    %v91 = vunpack.c.l.b16 %v52
    %v92 = vunpack.c.l.b16 %v53
    %v93 = vunpack.c.l.b16 %v54
    %v94 = vunpack.c.l.b16 %v55
    %v95 = vunpack.c.l.b16 %v56
    %v96 = vunpack.c.l.b16 %v57
    %v97 = vunpack.c.l.b16 %v58
    %v98 = vunpack.c.l.b16 %v59
    %v99 = vunpack.c.l.b16 %v60
    %v100 = vunpack.c.l.b16 %v61
    %v101 = vunpack.c.l.b16 %v62
    %v102 = vunpack.c.l.b16 %v63
    %v103 = vunpack.c.l.b16 %v64
    %v104 = vunpack.c.l.b16 %v65
    %v105 = vpack.c.b16 %v90, %v89
    %v106 = vpack.c.b16 %v92, %v91
    %v107 = vpack.c.b16 %v94, %v93
    %v108 = vpack.c.b16 %v96, %v95
    %v109 = vpack.c.b16 %v98, %v97
    %v110 = vpack.c.b16 %v100, %v99
    %v111 = vpack.c.b16 %v102, %v101
    %v112 = vpack.c.b16 %v104, %v103
    %121 = vmatprep.subr.bf16.mxu0 0
    %122 = vmatpush1.bf16.msra.mxu0 %v105
    %123 = vmatprep.subr.bf16.mxu0 0
    %124 = vmatpush1.bf16.msra.mxu0 %v106
    %125 = vmatprep.subr.bf16.mxu0 0
    %126 = vmatpush1.bf16.msra.mxu0 %v107
    %127 = vmatprep.subr.bf16.mxu0 0
    %128 = vmatpush1.bf16.msra.mxu0 %v108
    %129 = vmatprep.subr.bf16.mxu0 0
    %130 = vmatpush1.bf16.msra.mxu0 %v109
    %131 = vmatprep.subr.bf16.mxu0 0
    %132 = vmatpush1.bf16.msra.mxu0 %v110
    %133 = vmatprep.subr.bf16.mxu0 0
    %134 = vmatpush1.bf16.msra.mxu0 %v111
    %135 = vmatprep.subr.bf16.mxu0 0
    %136 = vmatpush1.bf16.msra.mxu0 %v112
    %137 = vmatprep.subr.bf16.mxu0 0
    %138 = vmatpush1.bf16.msra.mxu0 0
    %139 = vmatprep.subr.bf16.mxu0 0
    %140 = vmatpush1.bf16.msra.mxu0 0
    %141 = vmatprep.subr.bf16.mxu0 0
    %142 = vmatpush1.bf16.msra.mxu0 0
    %143 = vmatprep.subr.bf16.mxu0 0
    %144 = vmatpush1.bf16.msra.mxu0 0
    %145 = vmatprep.subr.bf16.mxu0 0
    %146 = vmatpush1.bf16.msra.mxu0 0
    %147 = vmatprep.subr.bf16.mxu0 0
    %148 = vmatpush1.bf16.msra.mxu0 0
    %149 = vmatprep.subr.bf16.mxu0 0
    %150 = vmatpush1.bf16.msra.mxu0 0
    %151 = vmatprep.subr.bf16.mxu0 0
    %152 = vmatpush1.bf16.msra.mxu0 0
    %153 = vmatprep.mubr.bf16.mxu0 0
    %154 = vmatmul.mubr.bf16.gmra.mrb[0].mxu0 %v49
    %v155 = vpop.f32.mrb[0].mxu0
    %v156 = vadd.f32 %v71, %v155
    %v157 = vpop.f32.mrb[0].mxu0
    %v158 = vpop.f32.mrb[0].mxu0
    %v159 = vpop.f32.mrb[0].mxu0
    %160 = vdwg.mxu0
    %v161 = vrot.slane %v156, 4
    %v162 = vadd.f32 %v156, %v161
    %v163 = vrot.slane %v162, 2
    %v164 = vadd.f32 %v162, %v163
    %v165 = vrot.slane %v164, 1
    %v166 = vadd.f32 %v164, %v165
    %v167 = vrcp.pop 8.0
    %v168 = vmul.f32 %v166, %v167
    %v169 = vsub.f32 %v156, %v168
    %v170 = vmul.f32 %v169, %v169
    %v171 = vrot.slane %v170, 4
    %v172 = vadd.f32 %v170, %v171
    %v173 = vrot.slane %v172, 2
    %v174 = vadd.f32 %v172, %v173
    %v175 = vrot.slane %v174, 1
    %v176 = vadd.f32 %v174, %v175
    %v177 = vmul.f32 %v176, %v167
    %v178 = vadd.f32 %v177, 0.001
    %v179 = vrsqrt.pop %v178
    %v180 = vmul.f32 %v169, %v179
    %v181 = vld [vmem:[%s3] sm:$0x1]
    %v183 = vlaneseq
    %v184 = vshrl.u32 %v183, 7
    %v185 = vsub.s32 0, %v184
    %v186 = vrot.slane %v181, %v185
    %v188 = vmul.f32 %v180, %v186
    %v189 = vld [vmem:[%s4] sm:$0x1]
    %v191 = vlaneseq
    %v192 = vshrl.u32 %v191, 7
    %v193 = vsub.s32 0, %v192
    %v194 = vrot.slane %v189, %v193
    %v196 = vadd.f32 %v188, %v194
    %v197 = vmax.f32 %v196, 0.0
    %v198 = vpack.c.bf16 %v197, %v197
    %v199 = vld [vmem:[%s5] sm:$0xf]
    %v200 = vld [vmem:[%s5 + $0x4] sm:$0xf]
    %v201 = vld [vmem:[%s5 + $0x8] sm:$0xf]
    %v202 = vld [vmem:[%s5 + $0xc] sm:$0xf]
    %v203 = vld [vmem:[%s5 + $0x10] sm:$0xf]
    %v204 = vld [vmem:[%s5 + $0x14] sm:$0xf]
    %v205 = vld [vmem:[%s5 + $0x18] sm:$0xf]
    %v206 = vld [vmem:[%s5 + $0x1c] sm:$0xf]
    %v207 = vld [vmem:[%s5 + $0x20] sm:$0xf]
    %v208 = vld [vmem:[%s5 + $0x24] sm:$0xf]
    %v209 = vld [vmem:[%s5 + $0x28] sm:$0xf]
    %v210 = vld [vmem:[%s5 + $0x2c] sm:$0xf]
    %v211 = vld [vmem:[%s5 + $0x30] sm:$0xf]
    %v212 = vld [vmem:[%s5 + $0x34] sm:$0xf]
    %v213 = vld [vmem:[%s5 + $0x38] sm:$0xf]
    %v214 = vld [vmem:[%s5 + $0x3c] sm:$0xf]
    %v215 = vld [vmem:[%s6] sm:$0x1]
    %v217 = vlaneseq
    %v218 = vshrl.u32 %v217, 7
    %v219 = vsub.s32 0, %v218
    %v220 = vrot.slane %v215, %v219
    %v238 = vunpack.c.l.b16 %v199
    %v239 = vunpack.c.l.b16 %v200
    %v240 = vunpack.c.l.b16 %v201
    %v241 = vunpack.c.l.b16 %v202
    %v242 = vunpack.c.l.b16 %v203
    %v243 = vunpack.c.l.b16 %v204
    %v244 = vunpack.c.l.b16 %v205
    %v245 = vunpack.c.l.b16 %v206
    %v246 = vunpack.c.l.b16 %v207
    %v247 = vunpack.c.l.b16 %v208
    %v248 = vunpack.c.l.b16 %v209
    %v249 = vunpack.c.l.b16 %v210
    %v250 = vunpack.c.l.b16 %v211
    %v251 = vunpack.c.l.b16 %v212
    %v252 = vunpack.c.l.b16 %v213
    %v253 = vunpack.c.l.b16 %v214
    %v254 = vpack.c.b16 %v239, %v238
    %v255 = vpack.c.b16 %v241, %v240
    %v256 = vpack.c.b16 %v243, %v242
    %v257 = vpack.c.b16 %v245, %v244
    %v258 = vpack.c.b16 %v247, %v246
    %v259 = vpack.c.b16 %v249, %v248
    %v260 = vpack.c.b16 %v251, %v250
    %v261 = vpack.c.b16 %v253, %v252
    %270 = vmatprep.subr.bf16.mxu0 0
    %271 = vmatpush1.bf16.msra.mxu0 %v254
    %272 = vmatprep.subr.bf16.mxu0 0
    %273 = vmatpush1.bf16.msra.mxu0 %v255
    %274 = vmatprep.subr.bf16.mxu0 0
    %275 = vmatpush1.bf16.msra.mxu0 %v256
    %276 = vmatprep.subr.bf16.mxu0 0
    %277 = vmatpush1.bf16.msra.mxu0 %v257
    %278 = vmatprep.subr.bf16.mxu0 0
    %279 = vmatpush1.bf16.msra.mxu0 %v258
    %280 = vmatprep.subr.bf16.mxu0 0
    %281 = vmatpush1.bf16.msra.mxu0 %v259
    %282 = vmatprep.subr.bf16.mxu0 0
    %283 = vmatpush1.bf16.msra.mxu0 %v260
    %284 = vmatprep.subr.bf16.mxu0 0
    %285 = vmatpush1.bf16.msra.mxu0 %v261
    %286 = vmatprep.subr.bf16.mxu0 0
    %287 = vmatpush1.bf16.msra.mxu0 0
    %288 = vmatprep.subr.bf16.mxu0 0
    %289 = vmatpush1.bf16.msra.mxu0 0
    %290 = vmatprep.subr.bf16.mxu0 0
    %291 = vmatpush1.bf16.msra.mxu0 0
    %292 = vmatprep.subr.bf16.mxu0 0
    %293 = vmatpush1.bf16.msra.mxu0 0
    %294 = vmatprep.subr.bf16.mxu0 0
    %295 = vmatpush1.bf16.msra.mxu0 0
    %296 = vmatprep.subr.bf16.mxu0 0
    %297 = vmatpush1.bf16.msra.mxu0 0
    %298 = vmatprep.subr.bf16.mxu0 0
    %299 = vmatpush1.bf16.msra.mxu0 0
    %300 = vmatprep.subr.bf16.mxu0 0
    %301 = vmatpush1.bf16.msra.mxu0 0
    %302 = vmatprep.mubr.bf16.mxu0 0
    %303 = vmatmul.mubr.bf16.gmra.mrb[0].mxu0 %v198
    %v304 = vpop.f32.mrb[0].mxu0
    %v305 = vadd.f32 %v220, %v304
    %v306 = vpop.f32.mrb[0].mxu0
    %v307 = vpop.f32.mrb[0].mxu0
    %v308 = vpop.f32.mrb[0].mxu0
    %309 = vdwg.mxu0
    %v310 = vrot.slane %v305, 4
    %v311 = vadd.f32 %v305, %v310
    %v312 = vrot.slane %v311, 2
    %v313 = vadd.f32 %v311, %v312
    %v314 = vrot.slane %v313, 1
    %v315 = vadd.f32 %v313, %v314
    %v316 = vmul.f32 %v315, %v167
    %v317 = vsub.f32 %v305, %v316
    %v318 = vmul.f32 %v317, %v317
    %v319 = vrot.slane %v318, 4
    %v320 = vadd.f32 %v318, %v319
    %v321 = vrot.slane %v320, 2
    %v322 = vadd.f32 %v320, %v321
    %v323 = vrot.slane %v322, 1
    %v324 = vadd.f32 %v322, %v323
    %v325 = vmul.f32 %v324, %v167
    %v326 = vadd.f32 %v325, 0.001
    %v327 = vrsqrt.pop %v326
    %v328 = vmul.f32 %v317, %v327
    %v329 = vld [vmem:[%s7] sm:$0x1]
    %v331 = vlaneseq
    %v332 = vshrl.u32 %v331, 7
    %v333 = vsub.s32 0, %v332
    %v334 = vrot.slane %v329, %v333
    %v336 = vmul.f32 %v328, %v334
    %v337 = vld [vmem:[%s8] sm:$0x1]
    %v339 = vlaneseq
    %v340 = vshrl.u32 %v339, 7
    %v341 = vsub.s32 0, %v340
    %v342 = vrot.slane %v337, %v341
    %v344 = vadd.f32 %v336, %v342
    %v345 = vmax.f32 %v344, 0.0
    %346 = vst [vmem:[#allocation5] sm:$0xff] %v345
    // Predicated region
    $region42: #{forward.1} parent=1 // pred_check
      _
    $region43: #{forward.1} parent=1 // pred_check_branch
      %348 = sbr.rel (0) target = $region45
    $region44: #{forward.1} parent=1 // pred_region
      %s350 = ssub.s32 128, 128
      %351 = vsyncadd [#allocation4], %s350
      %s353 = sshll.u32 [#allocation5], 4
      %s354 = int_to_ptr.vmem [resolvable:$true] %s353
      %356 = dma.vmem_to_hbm [thread:$0]  %s354, 128, %s9, [#allocation4]
    $region45: #{forward.1} parent=1 // pred_fallthru
      _
    // Predicated region
    $region46: #{forward.1} parent=1 // pred_check
      _
    $region47: #{forward.1} parent=1 // pred_check_branch
      %358 = sbr.rel (0) target = $region49
    $region48: #{forward.1} parent=1 // pred_region
      %359 = dma.done [#allocation4], 128
    $region49: #{forward.1} parent=1 // pred_fallthru
      _
    %360 = vsyncpa [#allocation3], 1
    %361 = vsyncpa [#allocation4], 1

</llo_original>
